<compile_context>
chip_gen: v7x
topology: tpu7x:2x2x1
jax: 0.10.0
libtpu: 0.0.40
codegen_flags: <defaults>
</compile_context>

<pallas_src>
import jax
import jax.numpy as jnp
from jax.experimental import pallas as pl
from jax.experimental.pallas import tpu as pltpu


def flash_sdpa_kernel(q_ref, k_ref, v_ref, m_ref, o_ref, m_sc, l_sc, acc_sc):
    """One (batch-tile, query-tile, key-tile) step of online-softmax attention."""
    kt = pl.program_id(2)

    @pl.when(kt == 0)
    def _init():
        m_sc[...] = jnp.full_like(m_sc, -jnp.inf)
        l_sc[...] = jnp.zeros_like(l_sc)
        acc_sc[...] = jnp.zeros_like(acc_sc)

    # Fold 1/sqrt(dk) into the (TB, TQ, D) q tile (S*D work, not S*S).
    scale = 1.0 / float(q_ref.shape[-1]) ** 0.5
    q = q_ref[...] * scale            # stays in the input dtype (bf16-friendly)
    k = k_ref[...]

    # q @ k^T without materializing k.T: batched contraction over the last dim,
    # f32 accumulation on the MXU.
    s = jnp.einsum("bqd,bkd->bqk", q, k, preferred_element_type=jnp.float32)

    # Online softmax update (all in f32).
    m_prev = m_sc[...]                                     # (TB, TQ, 1)
    m_new = jnp.maximum(m_prev, s.max(axis=-1, keepdims=True))
    alpha = jnp.exp(m_prev - m_new)
    p = jnp.exp(s - m_new)                                 # (TB, TQ, TK)
    l_sc[...] = alpha * l_sc[...] + p.sum(axis=-1, keepdims=True)
    acc_sc[...] = alpha * acc_sc[...] + jnp.einsum(
        "bqk,bkd->bqd", p.astype(v_ref.dtype), v_ref[...],
        preferred_element_type=jnp.float32)
    m_sc[...] = m_new

    @pl.when(kt == pl.num_programs(2) - 1)
    def _finalize():
        l = l_sc[...]
        inv_l = pl.reciprocal(l, approx=True)
        inv_l = inv_l * (2.0 - l * inv_l)        # one Newton step -> ~f32 exact
        mask = m_ref[...].astype(jnp.float32)    # (TB, TQ, 1) query-tile slice
        o_ref[...] = (acc_sc[...] * (inv_l * mask)).astype(o_ref.dtype)


def _choose_tiles(B, S):
    """Pick (TB, TQ, TK).

    TQ/TK are 128-aligned when S allows (v5e 128x128 MXU native, safe on
    v6e/v7x; sweep 256 on v7x), otherwise the full sequence.  When the
    sequence tile is small, several batch rows are fused per grid step so each
    step has enough rows to fill MXU/vreg tiles and amortize step overhead.
    """
    tile = 128 if S % 128 == 0 else S
    if tile >= 128:
        tb = 1
    else:
        cap = max(1, 256 // tile)
        tb = 1
        for d in range(1, B + 1):
            if B % d == 0 and d <= cap:
                tb = d
    return tb, tile, tile


def scale_dot_attention(q, k, v, mask):
    """q, k, v: (B, S, D); mask: (B, S, 1) or (B, S). Returns (B, S, D)."""
    B, S, D = q.shape
    assert k.shape == (B, S, D) and v.shape == (B, S, D)
    mask = mask.reshape(B, S, 1)

    TB, TQ, TK = _choose_tiles(B, S)
    grid = (B // TB, S // TQ, S // TK)

    return pl.pallas_call(
        flash_sdpa_kernel,
        out_shape=jax.ShapeDtypeStruct((B, S, D), q.dtype),
        grid=grid,
        in_specs=[
            pl.BlockSpec((TB, TQ, D), lambda b, qi, ki: (b, qi, 0)),   # q
            pl.BlockSpec((TB, TK, D), lambda b, qi, ki: (b, ki, 0)),   # k
            pl.BlockSpec((TB, TK, D), lambda b, qi, ki: (b, ki, 0)),   # v
            pl.BlockSpec((TB, TQ, 1), lambda b, qi, ki: (b, qi, 0)),   # mask slice
        ],
        out_specs=pl.BlockSpec((TB, TQ, D), lambda b, qi, ki: (b, qi, 0)),
        scratch_shapes=[
            pltpu.VMEM((TB, TQ, 1), jnp.float32),   # running max m
            pltpu.VMEM((TB, TQ, 1), jnp.float32),   # running denom l
            pltpu.VMEM((TB, TQ, D), jnp.float32),   # output accumulator
        ],
        compiler_params=pltpu.CompilerParams(
            dimension_semantics=("parallel", "parallel", "arbitrary")),
    )(q, k, v, mask)


def reference(q, k, v, mask):
    dk = q.shape[-1]
    att = jnp.einsum("bqd,bkd->bqk", q, k) / jnp.sqrt(jnp.float32(dk))
    att = jax.nn.softmax(att, axis=2)
    return jnp.einsum("bqk,bkd->bqd", att, v) * mask


def _check(B, S, D, dtype, atol, rtol, seed=0):
    key = jax.random.PRNGKey(seed)
    kq, kk, kv, km = jax.random.split(key, 4)
    q = jax.random.normal(kq, (B, S, D), dtype=dtype)
    k = jax.random.normal(kk, (B, S, D), dtype=dtype)
    v = jax.random.normal(kv, (B, S, D), dtype=dtype)
    # binary padding-style mask broadcast over the feature dim
    mask = (jax.random.uniform(km, (B, S, 1)) > 0.3).astype(dtype)

    out = jax.block_until_ready(scale_dot_attention(q, k, v, mask))
    ref = reference(q, k, v, mask)
    assert out.shape == (B, S, D)
    assert jnp.allclose(out, ref, atol=atol, rtol=rtol), (
        f"mismatch vs JAX reference at B={B} S={S} D={D}")


if __name__ == "__main__":
    # Module regime: tiny seq/feature, fused-batch path (TB=B, single key tile).
    _check(B=2, S=8, D=32, dtype=jnp.float32, atol=1e-4, rtol=1e-4)
    # Tiled flash path: multiple 128-wide query/key tiles, lane-dense D.
    _check(B=2, S=256, D=128, dtype=jnp.float32, atol=1e-4, rtol=1e-4)
    print("KERNEL_OK")
</pallas_src>

<mosaic_0001>
module attributes {stable_mosaic.version = 11 : i64} {
  func.func @flash_sdpa_kernel(%arg0: i32, %arg1: i32, %arg2: i32, %arg3: memref<2x8x32xf32, #tpu.memory_space<vmem>>, %arg4: memref<2x8x32xf32, #tpu.memory_space<vmem>>, %arg5: memref<2x8x32xf32, #tpu.memory_space<vmem>>, %arg6: memref<2x8x1xf32, #tpu.memory_space<vmem>>, %arg7: memref<2x8x32xf32, #tpu.memory_space<vmem>>, %arg8: memref<2x8x1xf32, #tpu.memory_space<vmem>>, %arg9: memref<2x8x1xf32, #tpu.memory_space<vmem>>, %arg10: memref<2x8x32xf32, #tpu.memory_space<vmem>>) attributes {dimension_semantics = [#tpu.dimension_semantics<parallel>, #tpu.dimension_semantics<parallel>, #tpu.dimension_semantics<arbitrary>], iteration_bounds = array<i64: 1, 1, 1>, scalar_prefetch = 0 : i64, scratch_operands = 3 : i64, tpu.core_type = #tpu.core_type<tc>, window_params = [{transform_indices = @transform_0, window_bounds = array<i64: 2, 8, 32>}, {transform_indices = @transform_1, window_bounds = array<i64: 2, 8, 32>}, {transform_indices = @transform_2, window_bounds = array<i64: 2, 8, 32>}, {transform_indices = @transform_3, window_bounds = array<i64: 2, 8, 1>}, {transform_indices = @transform_4, window_bounds = array<i64: 2, 8, 32>}]} {
    %c0_i32 = arith.constant 0 : i32
    %0 = arith.cmpi eq, %arg2, %c0_i32 : i32
    %1 = arith.extui %0 : i1 to i32
    %c0_i32_0 = arith.constant 0 : i32
    %2 = arith.cmpi ne, %1, %c0_i32_0 : i32
    scf.if %2 {
      %cst_33 = arith.constant 0xFF800000 : f32
      %34 = vector.broadcast %cst_33 : f32 to vector<2x8x1xf32>
      %c0_34 = arith.constant 0 : index
      %c0_35 = arith.constant 0 : index
      %c0_36 = arith.constant 0 : index
      %35 = vector.load %arg8[%c0_34, %c0_35, %c0_36] : memref<2x8x1xf32, #tpu.memory_space<vmem>>, vector<2x8x1xf32>
      tpu.vector_store %arg8[%c0_34, %c0_35, %c0_36], %34 {strides = array<i32>} : memref<2x8x1xf32, #tpu.memory_space<vmem>>, vector<2x8x1xf32>,
      %cst_37 = arith.constant 0.000000e+00 : f32
      %36 = vector.broadcast %cst_37 : f32 to vector<2x8x1xf32>
      %c0_38 = arith.constant 0 : index
      %c0_39 = arith.constant 0 : index
      %c0_40 = arith.constant 0 : index
      %37 = vector.load %arg9[%c0_38, %c0_39, %c0_40] : memref<2x8x1xf32, #tpu.memory_space<vmem>>, vector<2x8x1xf32>
      tpu.vector_store %arg9[%c0_38, %c0_39, %c0_40], %36 {strides = array<i32>} : memref<2x8x1xf32, #tpu.memory_space<vmem>>, vector<2x8x1xf32>,
      %cst_41 = arith.constant 0.000000e+00 : f32
      %38 = vector.broadcast %cst_41 : f32 to vector<2x8x32xf32>
      %c0_42 = arith.constant 0 : index
      %c0_43 = arith.constant 0 : index
      %c0_44 = arith.constant 0 : index
      %39 = vector.load %arg10[%c0_42, %c0_43, %c0_44] : memref<2x8x32xf32, #tpu.memory_space<vmem>>, vector<2x8x32xf32>
      tpu.vector_store %arg10[%c0_42, %c0_43, %c0_44], %38 {strides = array<i32>} : memref<2x8x32xf32, #tpu.memory_space<vmem>>, vector<2x8x32xf32>,
    } else {
    }
    %c0 = arith.constant 0 : index
    %c0_1 = arith.constant 0 : index
    %c0_2 = arith.constant 0 : index
    %3 = vector.load %arg3[%c0, %c0_1, %c0_2] : memref<2x8x32xf32, #tpu.memory_space<vmem>>, vector<2x8x32xf32>
    %cst = arith.constant 0.176776692 : f32
    %4 = vector.broadcast %cst : f32 to vector<2x8x32xf32>
    %5 = arith.mulf %3, %4 : vector<2x8x32xf32>
    %c0_3 = arith.constant 0 : index
    %c0_4 = arith.constant 0 : index
    %c0_5 = arith.constant 0 : index
    %6 = vector.load %arg4[%c0_3, %c0_4, %c0_5] : memref<2x8x32xf32, #tpu.memory_space<vmem>>, vector<2x8x32xf32>
    "tpu.trace_start"() <{level = 10 : i32, message = "bqd,bkd->bqk"}> : () -> ()
    %cst_6 = arith.constant dense<0.000000e+00> : vector<2x8x8xf32>
    %7 = tpu.matmul %5, %6, %cst_6 {dimension_numbers = #tpu.dot_dimension_numbers<[2], [2], [1], [1], [0, 0, 0, 1, 1, 1], [0], [0]>} : vector<2x8x32xf32>, vector<2x8x32xf32>, vector<2x8x8xf32> -> vector<2x8x8xf32>
    "tpu.trace_stop"() : () -> ()
    %c0_7 = arith.constant 0 : index
    %c0_8 = arith.constant 0 : index
    %c0_9 = arith.constant 0 : index
    %8 = vector.load %arg8[%c0_7, %c0_8, %c0_9] : memref<2x8x1xf32, #tpu.memory_space<vmem>>, vector<2x8x1xf32>
    %cst_10 = arith.constant dense<0xFF800000> : vector<2x8xf32>
    %9 = vector.multi_reduction <maximumf>, %7, %cst_10 [2] : vector<2x8x8xf32> to vector<2x8xf32>
    %10 = vector.shape_cast %9 : vector<2x8xf32> to vector<2x8x1xf32>
    %11 = arith.maximumf %8, %10 : vector<2x8x1xf32>
    %12 = arith.subf %8, %11 : vector<2x8x1xf32>
    %13 = math.exp %12 : vector<2x8x1xf32>
    %14 = vector.broadcast %11 : vector<2x8x1xf32> to vector<2x8x8xf32>
    %15 = arith.subf %7, %14 : vector<2x8x8xf32>
    %16 = math.exp %15 : vector<2x8x8xf32>
    %c0_11 = arith.constant 0 : index
    %c0_12 = arith.constant 0 : index
    %c0_13 = arith.constant 0 : index
    %17 = vector.load %arg9[%c0_11, %c0_12, %c0_13] : memref<2x8x1xf32, #tpu.memory_space<vmem>>, vector<2x8x1xf32>
    %18 = arith.mulf %13, %17 : vector<2x8x1xf32>
    %cst_14 = arith.constant dense<0.000000e+00> : vector<2x8xf32>
    %19 = vector.multi_reduction <add>, %16, %cst_14 [2] : vector<2x8x8xf32> to vector<2x8xf32>
    %20 = vector.shape_cast %19 : vector<2x8xf32> to vector<2x8x1xf32>
    %21 = arith.addf %18, %20 : vector<2x8x1xf32>
    %c0_15 = arith.constant 0 : index
    %c0_16 = arith.constant 0 : index
    %c0_17 = arith.constant 0 : index
    %22 = vector.load %arg9[%c0_15, %c0_16, %c0_17] : memref<2x8x1xf32, #tpu.memory_space<vmem>>, vector<2x8x1xf32>
    tpu.vector_store %arg9[%c0_15, %c0_16, %c0_17], %21 {strides = array<i32>} : memref<2x8x1xf32, #tpu.memory_space<vmem>>, vector<2x8x1xf32>,
    %c0_18 = arith.constant 0 : index
    %c0_19 = arith.constant 0 : index
    %c0_20 = arith.constant 0 : index
    %23 = vector.load %arg10[%c0_18, %c0_19, %c0_20] : memref<2x8x32xf32, #tpu.memory_space<vmem>>, vector<2x8x32xf32>
    %24 = vector.broadcast %13 : vector<2x8x1xf32> to vector<2x8x32xf32>
    %25 = arith.mulf %24, %23 : vector<2x8x32xf32>
    %c0_21 = arith.constant 0 : index
    %c0_22 = arith.constant 0 : index
    %c0_23 = arith.constant 0 : index
    %26 = vector.load %arg5[%c0_21, %c0_22, %c0_23] : memref<2x8x32xf32, #tpu.memory_space<vmem>>, vector<2x8x32xf32>
    "tpu.trace_start"() <{level = 10 : i32, message = "bqk,bkd->bqd"}> : () -> ()
    %cst_24 = arith.constant dense<0.000000e+00> : vector<2x8x32xf32>
    %27 = tpu.matmul %16, %26, %cst_24 {dimension_numbers = #tpu.dot_dimension_numbers<[2], [1], [1], [2], [0, 0, 0, 1, 1, 2], [0], [0]>} : vector<2x8x8xf32>, vector<2x8x32xf32>, vector<2x8x32xf32> -> vector<2x8x32xf32>
    "tpu.trace_stop"() : () -> ()
    %28 = arith.addf %25, %27 : vector<2x8x32xf32>
    %c0_25 = arith.constant 0 : index
    %c0_26 = arith.constant 0 : index
    %c0_27 = arith.constant 0 : index
    %29 = vector.load %arg10[%c0_25, %c0_26, %c0_27] : memref<2x8x32xf32, #tpu.memory_space<vmem>>, vector<2x8x32xf32>
    tpu.vector_store %arg10[%c0_25, %c0_26, %c0_27], %28 {strides = array<i32>} : memref<2x8x32xf32, #tpu.memory_space<vmem>>, vector<2x8x32xf32>,
    %c0_28 = arith.constant 0 : index
    %c0_29 = arith.constant 0 : index
    %c0_30 = arith.constant 0 : index
    %30 = vector.load %arg8[%c0_28, %c0_29, %c0_30] : memref<2x8x1xf32, #tpu.memory_space<vmem>>, vector<2x8x1xf32>
    tpu.vector_store %arg8[%c0_28, %c0_29, %c0_30], %11 {strides = array<i32>} : memref<2x8x1xf32, #tpu.memory_space<vmem>>, vector<2x8x1xf32>,
    %c0_i32_31 = arith.constant 0 : i32
    %31 = arith.cmpi eq, %arg2, %c0_i32_31 : i32
    %32 = arith.extui %31 : i1 to i32
    %c0_i32_32 = arith.constant 0 : i32
    %33 = arith.cmpi ne, %32, %c0_i32_32 : i32
    scf.if %33 {
      %c0_33 = arith.constant 0 : index
      %c0_34 = arith.constant 0 : index
      %c0_35 = arith.constant 0 : index
      %34 = vector.load %arg9[%c0_33, %c0_34, %c0_35] : memref<2x8x1xf32, #tpu.memory_space<vmem>>, vector<2x8x1xf32>
      %35 = tpu.reciprocal %34 {approx = true} : vector<2x8x1xf32> -> vector<2x8x1xf32>
      %36 = arith.mulf %34, %35 : vector<2x8x1xf32>
      %cst_36 = arith.constant 2.000000e+00 : f32
      %37 = vector.broadcast %cst_36 : f32 to vector<2x8x1xf32>
      %38 = arith.subf %37, %36 : vector<2x8x1xf32>
      %39 = arith.mulf %35, %38 : vector<2x8x1xf32>
      %c0_37 = arith.constant 0 : index
      %c0_38 = arith.constant 0 : index
      %c0_39 = arith.constant 0 : index
      %40 = vector.load %arg6[%c0_37, %c0_38, %c0_39] : memref<2x8x1xf32, #tpu.memory_space<vmem>>, vector<2x8x1xf32>
      %c0_40 = arith.constant 0 : index
      %c0_41 = arith.constant 0 : index
      %c0_42 = arith.constant 0 : index
      %41 = vector.load %arg10[%c0_40, %c0_41, %c0_42] : memref<2x8x32xf32, #tpu.memory_space<vmem>>, vector<2x8x32xf32>
      %42 = arith.mulf %39, %40 : vector<2x8x1xf32>
      %43 = vector.broadcast %42 : vector<2x8x1xf32> to vector<2x8x32xf32>
      %44 = arith.mulf %41, %43 : vector<2x8x32xf32>
      %c0_43 = arith.constant 0 : index
      %c0_44 = arith.constant 0 : index
      %c0_45 = arith.constant 0 : index
      %45 = vector.load %arg7[%c0_43, %c0_44, %c0_45] : memref<2x8x32xf32, #tpu.memory_space<vmem>>, vector<2x8x32xf32>
      tpu.vector_store %arg7[%c0_43, %c0_44, %c0_45], %44 {strides = array<i32>} : memref<2x8x32xf32, #tpu.memory_space<vmem>>, vector<2x8x32xf32>,
    } else {
    }
    return
  }
  func.func @transform_0(%arg0: i32, %arg1: i32, %arg2: i32) -> (i32, i32, i32) {
    %c0_i32 = arith.constant 0 : i32
    %c0_i32_0 = arith.constant 0 : i32
    return %arg0, %arg1, %c0_i32 : i32, i32, i32
  }
  func.func @transform_1(%arg0: i32, %arg1: i32, %arg2: i32) -> (i32, i32, i32) {
    %c0_i32 = arith.constant 0 : i32
    %c0_i32_0 = arith.constant 0 : i32
    return %arg0, %arg2, %c0_i32 : i32, i32, i32
  }
  func.func @transform_2(%arg0: i32, %arg1: i32, %arg2: i32) -> (i32, i32, i32) {
    %c0_i32 = arith.constant 0 : i32
    %c0_i32_0 = arith.constant 0 : i32
    return %arg0, %arg2, %c0_i32 : i32, i32, i32
  }
  func.func @transform_3(%arg0: i32, %arg1: i32, %arg2: i32) -> (i32, i32, i32) {
    %c0_i32 = arith.constant 0 : i32
    %c0_i32_0 = arith.constant 0 : i32
    return %arg0, %arg1, %c0_i32 : i32, i32, i32
  }
  func.func @transform_4(%arg0: i32, %arg1: i32, %arg2: i32) -> (i32, i32, i32) {
    %c0_i32 = arith.constant 0 : i32
    %c0_i32_0 = arith.constant 0 : i32
    return %arg0, %arg1, %c0_i32 : i32, i32, i32
  }
}

</mosaic_0001>

<llo_original>
// kernel: tpu_custom_call.1
$region0: #{tpu_custom_call.1}
  #allocation0 [shape = 'u32[]', space=smem, size = 0x4, offset = 0x4, fixed_abs, tag = 'smem constant byte address 0x4 - core index']
  #allocation1 [shape = 'u32[144,128]{1,0:T(1,128)}', space=vmem, size = 0x12000, scoped, tag = 'internal scratch']
  #allocation2 [shape = 'f32[2,8,1]{2,1,0:T(8,128)}', space=vmem, size = 0x2000, scoped, tag = 'scratch operand']
  #allocation3 [shape = 'f32[2,8,1]{2,1,0:T(8,128)}', space=vmem, size = 0x2000, scoped, tag = 'scratch operand']
  #allocation4 [shape = 'f32[2,8,32]{2,1,0:T(8,128)}', space=vmem, size = 0x2000, scoped, tag = 'scratch operand']
  %s0 = inlined_call_operand.vmem [shape: f32[2,8,32], index: 0, kind: input, shape index: {}]
  %s1 = inlined_call_operand.hbm [shape: f32[2,8,32], index: 1, kind: input, shape index: {}]
  %s2 = inlined_call_operand.hbm [shape: f32[2,8,32], index: 2, kind: input, shape index: {}]
  %s3 = inlined_call_operand.vmem [shape: f32[2,8,1], index: 3, kind: input, shape index: {}]
  %s4 = inlined_call_operand.hbm [shape: f32[2,8,32], index: 4, kind: output, shape index: {}]
  %s5 = sld [smem:[#allocation0]]
  $region42: #{tpu_custom_call.1} parent=0
    _
  %s7 = ssub.s32 1, %s5
  %s8 = scalar_select 0, %s7, %s5
  $region1: #{tpu_custom_call.1} parent=0
    #allocation5 [shape = 'u8[8192]{0}', space=vmem, size = 0x2000, scoped, tag = 'input window, operand 1, single buffered']
    #allocation6 [shape = 's32[1]{0}', space=sflag, size = 0x4, scoped, tag = 'scoped memory for tpu_custom_call.1']
    #allocation7 [shape = 's32[1]{0}', space=sflag, size = 0x4, scoped, tag = 'scoped memory for tpu_custom_call.1']
    #allocation8 [shape = 'u8[8192]{0}', space=vmem, size = 0x2000, scoped, tag = 'input window, operand 2, single buffered']
    #allocation9 [shape = 's32[1]{0}', space=sflag, size = 0x4, scoped, tag = 'scoped memory for tpu_custom_call.1']
    #allocation10 [shape = 'u8[8192]{0}', space=vmem, size = 0x2000, scoped, tag = 'output window, operand 0, single buffered']
    %9 = vsyncpa [#allocation6], 0
    %10 = vsyncpa [#allocation9], 0
    %11 = vsyncpa [#allocation7], 0
    // Predicated region
    $region2: #{tpu_custom_call.1} parent=1 // pred_check
      _
    $region3: #{tpu_custom_call.1} parent=1 // pred_check_branch
      %13 = sbr.rel (0) target = $region5
    $region4: #{tpu_custom_call.1} parent=1 // pred_region
      _
    $region5: #{tpu_custom_call.1} parent=1 // pred_fallthru
      _
    // Predicated region
    $region6: #{tpu_custom_call.1} parent=1 // pred_check
      _
    $region7: #{tpu_custom_call.1} parent=1 // pred_check_branch
      %15 = sbr.rel (0) target = $region9
    $region8: #{tpu_custom_call.1} parent=1 // pred_region
      %s17 = ssub.s32 256, 256
      %18 = vsyncadd [#allocation6], %s17
      %s19 = sshll.u32 [#allocation5], 4
      %s20 = int_to_ptr.vmem [resolvable:$true] %s19
      %25 = dma.hbm_to_vmem [thread:$0]  %s1, 256, %s20, [#allocation6], 128, 128, 8
    $region9: #{tpu_custom_call.1} parent=1 // pred_fallthru
      _
    // Predicated region
    $region10: #{tpu_custom_call.1} parent=1 // pred_check
      _
    $region11: #{tpu_custom_call.1} parent=1 // pred_check_branch
      %27 = sbr.rel (0) target = $region13
    $region12: #{tpu_custom_call.1} parent=1 // pred_region
      %s29 = ssub.s32 256, 256
      %30 = vsyncadd [#allocation9], %s29
      %s31 = sshll.u32 [#allocation8], 4
      %s32 = int_to_ptr.vmem [resolvable:$true] %s31
      %37 = dma.hbm_to_vmem [thread:$0]  %s2, 256, %s32, [#allocation9], 128, 128, 8
    $region13: #{tpu_custom_call.1} parent=1 // pred_fallthru
      _
    // Predicated region
    $region14: #{tpu_custom_call.1} parent=1 // pred_check
      _
    $region15: #{tpu_custom_call.1} parent=1 // pred_check_branch
      %39 = sbr.rel (0) target = $region17
    $region16: #{tpu_custom_call.1} parent=1 // pred_region
      _
    $region17: #{tpu_custom_call.1} parent=1 // pred_fallthru
      _
    // Predicated region
    $region18: #{tpu_custom_call.1} parent=1 // pred_check
      _
    $region19: #{tpu_custom_call.1} parent=1 // pred_check_branch
      %41 = sbr.rel (0) target = $region21
    $region20: #{tpu_custom_call.1} parent=1 // pred_region
      %42 = dma.done [#allocation6], 256
    $region21: #{tpu_custom_call.1} parent=1 // pred_fallthru
      _
    // Predicated region
    $region22: #{tpu_custom_call.1} parent=1 // pred_check
      _
    $region23: #{tpu_custom_call.1} parent=1 // pred_check_branch
      %44 = sbr.rel (0) target = $region25
    $region24: #{tpu_custom_call.1} parent=1 // pred_region
      %45 = dma.done [#allocation9], 256
    $region25: #{tpu_custom_call.1} parent=1 // pred_fallthru
      _
    %p46 = scmp.eq.s32.totalorder 0, 0
    // Predicated region
    $region26: #{tpu_custom_call.1} parent=1 // pred_check
      %p47 = pneg %p46
    $region27: #{tpu_custom_call.1} parent=1 // pred_check_branch
      %49 = sbr.rel (%p47) target = $region29
    $region28: #{tpu_custom_call.1} parent=1 // pred_region
      %vm50 = vcmask 7168
      %51 = vst.msk [vmem:[#allocation2] sm:$0xff] %vm50, -inf
      %52 = vst.msk [vmem:[#allocation2 + $0x8] sm:$0xff] %vm50, -inf
      %53 = vst.msk [vmem:[#allocation3] sm:$0xff] %vm50, 0.0
      %54 = vst.msk [vmem:[#allocation3 + $0x8] sm:$0xff] %vm50, 0.0
      %vm55 = vcmask 261120
      %56 = vst.msk [vmem:[#allocation4] sm:$0xff] %vm55, 0.0
      %57 = vst.msk [vmem:[#allocation4 + $0x8] sm:$0xff] %vm55, 0.0
    $region29: #{tpu_custom_call.1} parent=1 // pred_fallthru
      _
    %v58 = vld [vmem:[%s0] sm:$0xff]
    %v59 = vld [vmem:[%s0 + $0x8] sm:$0xff]
    %v60 = vmul.f32 %v58, 0.17677669
    %v61 = vmul.f32 %v59, 0.17677669
    %v62 = vld [vmem:[#allocation5] sm:$0xff]
    %v63 = vld [vmem:[#allocation5 + $0x8] sm:$0xff]
    %vm64 = vcmask 261120
    %v66 = vsel %vm64, %v60, 0
    %v69 = vsel %vm64, %v62, 0
    %71 = vmatprep.subr.mxu0 0.0
    %72 = vmatpush1.xpose.msra.mxu0 %v69
    %73 = vmatprep.subr.mxu0 0.0
    %74 = vmatpush1.xpose.msra.mxu0 0.0
    %75 = vmatprep.subr.mxu0 0.0
    %76 = vmatpush1.xpose.msra.mxu0 0.0
    %77 = vmatprep.subr.mxu0 0.0
    %78 = vmatpush1.xpose.msra.mxu0 0.0
    %79 = vmatprep.subr.mxu0 0.0
    %80 = vmatpush1.xpose.msra.mxu0 0.0
    %81 = vmatprep.subr.mxu0 0.0
    %82 = vmatpush1.xpose.msra.mxu0 0.0
    %83 = vmatprep.subr.mxu0 0.0
    %84 = vmatpush1.xpose.msra.mxu0 0.0
    %85 = vmatprep.subr.mxu0 0.0
    %86 = vmatpush1.xpose.msra.mxu0 0.0
    %87 = vmatprep.subr.mxu0 0.0
    %88 = vmatpush1.xpose.msra.mxu0 0.0
    %89 = vmatprep.subr.mxu0 0.0
    %90 = vmatpush1.xpose.msra.mxu0 0.0
    %91 = vmatprep.subr.mxu0 0.0
    %92 = vmatpush1.xpose.msra.mxu0 0.0
    %93 = vmatprep.subr.mxu0 0.0
    %94 = vmatpush1.xpose.msra.mxu0 0.0
    %95 = vmatprep.subr.mxu0 0.0
    %96 = vmatpush1.xpose.msra.mxu0 0.0
    %97 = vmatprep.subr.mxu0 0.0
    %98 = vmatpush1.xpose.msra.mxu0 0.0
    %99 = vmatprep.subr.mxu0 0.0
    %100 = vmatpush1.xpose.msra.mxu0 0.0
    %101 = vmatprep.subr.mxu0 0.0
    %102 = vmatpush1.xpose.msra.mxu0 0.0
    %103 = vmatprep.subr.mxu0 0.0
    %104 = vmatpush1.xpose.msra.mxu0 0.0
    %105 = vmatprep.subr.mxu0 0.0
    %106 = vmatpush1.xpose.msra.mxu0 0.0
    %107 = vmatprep.subr.mxu0 0.0
    %108 = vmatpush1.xpose.msra.mxu0 0.0
    %109 = vmatprep.subr.mxu0 0.0
    %110 = vmatpush1.xpose.msra.mxu0 0.0
    %111 = vmatprep.subr.mxu0 0.0
    %112 = vmatpush1.xpose.msra.mxu0 0.0
    %113 = vmatprep.subr.mxu0 0.0
    %114 = vmatpush1.xpose.msra.mxu0 0.0
    %115 = vmatprep.subr.mxu0 0.0
    %116 = vmatpush1.xpose.msra.mxu0 0.0
    %117 = vmatprep.subr.mxu0 0.0
    %118 = vmatpush1.xpose.msra.mxu0 0.0
    %119 = vmatprep.subr.mxu0 0.0
    %120 = vmatpush1.xpose.msra.mxu0 0.0
    %121 = vmatprep.subr.mxu0 0.0
    %122 = vmatpush1.xpose.msra.mxu0 0.0
    %123 = vmatprep.subr.mxu0 0.0
    %124 = vmatpush1.xpose.msra.mxu0 0.0
    %125 = vmatprep.subr.mxu0 0.0
    %126 = vmatpush1.xpose.msra.mxu0 0.0
    %127 = vmatprep.subr.mxu0 0.0
    %128 = vmatpush1.xpose.msra.mxu0 0.0
    %129 = vmatprep.subr.mxu0 0.0
    %130 = vmatpush1.xpose.msra.mxu0 0.0
    %131 = vmatprep.subr.mxu0 0.0
    %132 = vmatpush1.xpose.msra.mxu0 0.0
    %133 = vmatprep.subr.mxu0 0.0
    %134 = vmatpush1.xpose.msra.mxu0 0.0
    %135 = vmatprep.mubr.f32.mxu0 0.0
    %136 = vmatmul.mubr.f32.gmra.mrb[0].mxu0 %v66
    %v137 = vpop.f32.mrb[0].mxu0
    %v138 = vadd.f32 0.0, %v137
    %v139 = vpop.f32.mrb[0].mxu0
    %140 = vdwg.mxu0
    %v142 = vsel %vm64, %v61, 0
    %v145 = vsel %vm64, %v63, 0
    %147 = vmatprep.subr.mxu0 0.0
    %148 = vmatpush1.xpose.msra.mxu0 %v145
    %149 = vmatprep.subr.mxu0 0.0
    %150 = vmatpush1.xpose.msra.mxu0 0.0
    %151 = vmatprep.subr.mxu0 0.0
    %152 = vmatpush1.xpose.msra.mxu0 0.0
    %153 = vmatprep.subr.mxu0 0.0
    %154 = vmatpush1.xpose.msra.mxu0 0.0
    %155 = vmatprep.subr.mxu0 0.0
    %156 = vmatpush1.xpose.msra.mxu0 0.0
    %157 = vmatprep.subr.mxu0 0.0
    %158 = vmatpush1.xpose.msra.mxu0 0.0
    %159 = vmatprep.subr.mxu0 0.0
    %160 = vmatpush1.xpose.msra.mxu0 0.0
    %161 = vmatprep.subr.mxu0 0.0
    %162 = vmatpush1.xpose.msra.mxu0 0.0
    %163 = vmatprep.subr.mxu0 0.0
    %164 = vmatpush1.xpose.msra.mxu0 0.0
    %165 = vmatprep.subr.mxu0 0.0
    %166 = vmatpush1.xpose.msra.mxu0 0.0
    %167 = vmatprep.subr.mxu0 0.0
    %168 = vmatpush1.xpose.msra.mxu0 0.0
    %169 = vmatprep.subr.mxu0 0.0
    %170 = vmatpush1.xpose.msra.mxu0 0.0
    %171 = vmatprep.subr.mxu0 0.0
    %172 = vmatpush1.xpose.msra.mxu0 0.0
    %173 = vmatprep.subr.mxu0 0.0
    %174 = vmatpush1.xpose.msra.mxu0 0.0
    %175 = vmatprep.subr.mxu0 0.0
    %176 = vmatpush1.xpose.msra.mxu0 0.0
    %177 = vmatprep.subr.mxu0 0.0
    %178 = vmatpush1.xpose.msra.mxu0 0.0
    %179 = vmatprep.subr.mxu0 0.0
    %180 = vmatpush1.xpose.msra.mxu0 0.0
    %181 = vmatprep.subr.mxu0 0.0
    %182 = vmatpush1.xpose.msra.mxu0 0.0
    %183 = vmatprep.subr.mxu0 0.0
    %184 = vmatpush1.xpose.msra.mxu0 0.0
    %185 = vmatprep.subr.mxu0 0.0
    %186 = vmatpush1.xpose.msra.mxu0 0.0
    %187 = vmatprep.subr.mxu0 0.0
    %188 = vmatpush1.xpose.msra.mxu0 0.0
    %189 = vmatprep.subr.mxu0 0.0
    %190 = vmatpush1.xpose.msra.mxu0 0.0
    %191 = vmatprep.subr.mxu0 0.0
    %192 = vmatpush1.xpose.msra.mxu0 0.0
    %193 = vmatprep.subr.mxu0 0.0
    %194 = vmatpush1.xpose.msra.mxu0 0.0
    %195 = vmatprep.subr.mxu0 0.0
    %196 = vmatpush1.xpose.msra.mxu0 0.0
    %197 = vmatprep.subr.mxu0 0.0
    %198 = vmatpush1.xpose.msra.mxu0 0.0
    %199 = vmatprep.subr.mxu0 0.0
    %200 = vmatpush1.xpose.msra.mxu0 0.0
    %201 = vmatprep.subr.mxu0 0.0
    %202 = vmatpush1.xpose.msra.mxu0 0.0
    %203 = vmatprep.subr.mxu0 0.0
    %204 = vmatpush1.xpose.msra.mxu0 0.0
    %205 = vmatprep.subr.mxu0 0.0
    %206 = vmatpush1.xpose.msra.mxu0 0.0
    %207 = vmatprep.subr.mxu0 0.0
    %208 = vmatpush1.xpose.msra.mxu0 0.0
    %209 = vmatprep.subr.mxu0 0.0
    %210 = vmatpush1.xpose.msra.mxu0 0.0
    %211 = vmatprep.mubr.f32.mxu0 0.0
    %212 = vmatmul.mubr.f32.gmra.mrb[0].mxu0 %v142
    %v213 = vpop.f32.mrb[0].mxu0
    %v214 = vadd.f32 0.0, %v213
    %v215 = vpop.f32.mrb[0].mxu0
    %216 = vdwg.mxu0
    %v217 = vld [vmem:[#allocation2] sm:$0xff]
    %v218 = vld [vmem:[#allocation2 + $0x8] sm:$0xff]
    %vm219 = vcmask 64512
    %v220 = vsel %vm219, %v138, -inf
    %221 = vmax.xlane.f32.xlu0 %v220
    %v222 = vpop.xlane.xlu0 %221
    %v223 = vsel %vm219, %v214, -inf
    %224 = vmax.xlane.f32.xlu0 %v223
    %v225 = vpop.xlane.xlu0 %224
    %v226 = vmax.f32 %v217, %v222
    %v227 = vmax.f32 %v218, %v225
    %v228 = vsub.f32 %v217, %v226
    %v229 = vsub.f32 %v218, %v227
    %v230 = vmul.f32 %v228, 1.442695
    %v231 = vpow.pop %v230
    %v232 = vmul.f32 %v229, 1.442695
    %v233 = vpow.pop %v232
    %235 = vset.pattern.permute.xlu0 0
    %236 = vperm.xlu0 %235, %v226
    %v237 = vpop.permute.xlu0 %236
    %240 = vset.pattern.permute.xlu0 0
    %241 = vperm.xlu0 %240, %v227
    %v242 = vpop.permute.xlu0 %241
    %v244 = vsub.f32 %v138, %v237
    %v245 = vsub.f32 %v214, %v242
    %v246 = vmul.f32 %v244, 1.442695
    %v247 = vpow.pop %v246
    %v248 = vmul.f32 %v245, 1.442695
    %v249 = vpow.pop %v248
    %v250 = vld [vmem:[#allocation3] sm:$0xff]
    %v251 = vld [vmem:[#allocation3 + $0x8] sm:$0xff]
    %v252 = vmul.f32 %v231, %v250
    %v253 = vmul.f32 %v233, %v251
    %v254 = vsel %vm219, %v247, 0.0
    %255 = vadd.xlane.f32.xlu0 %v254
    %v256 = vpop.xlane.xlu0 %255
    %v257 = vsel %vm219, %v249, 0.0
    %258 = vadd.xlane.f32.xlu0 %v257
    %v259 = vpop.xlane.xlu0 %258
    %v260 = vadd.f32 %v252, %v256
    %v261 = vadd.f32 %v253, %v259
    %vm262 = vcmask 7168
    %263 = vst.msk [vmem:[#allocation3] sm:$0xff] %vm262, %v260
    %264 = vst.msk [vmem:[#allocation3 + $0x8] sm:$0xff] %vm262, %v261
    %v265 = vld [vmem:[#allocation4] sm:$0xff]
    %v266 = vld [vmem:[#allocation4 + $0x8] sm:$0xff]
    %268 = vset.pattern.permute.xlu0 0
    %269 = vperm.xlu0 %268, %v231
    %v270 = vpop.permute.xlu0 %269
    %273 = vset.pattern.permute.xlu0 0
    %274 = vperm.xlu0 %273, %v233
    %v275 = vpop.permute.xlu0 %274
    %v277 = vmul.f32 %v270, %v265
    %v278 = vmul.f32 %v275, %v266
    %v279 = vld [vmem:[#allocation8] sm:$0xff]
    %v280 = vld [vmem:[#allocation8 + $0x8] sm:$0xff]
    %v282 = vsel %vm219, %v247, 0
    %284 = vmatprep.subr.mxu0 0.0
    %285 = vmatpush1.msra.mxu0 %v279
    %286 = vmatprep.subr.mxu0 0.0
    %287 = vmatpush1.msra.mxu0 0.0
    %288 = vmatprep.subr.mxu0 0.0
    %289 = vmatpush1.msra.mxu0 0.0
    %290 = vmatprep.subr.mxu0 0.0
    %291 = vmatpush1.msra.mxu0 0.0
    %292 = vmatprep.subr.mxu0 0.0
    %293 = vmatpush1.msra.mxu0 0.0
    %294 = vmatprep.subr.mxu0 0.0
    %295 = vmatpush1.msra.mxu0 0.0
    %296 = vmatprep.subr.mxu0 0.0
    %297 = vmatpush1.msra.mxu0 0.0
    %298 = vmatprep.subr.mxu0 0.0
    %299 = vmatpush1.msra.mxu0 0.0
    %300 = vmatprep.subr.mxu0 0.0
    %301 = vmatpush1.msra.mxu0 0.0
    %302 = vmatprep.subr.mxu0 0.0
    %303 = vmatpush1.msra.mxu0 0.0
    %304 = vmatprep.subr.mxu0 0.0
    %305 = vmatpush1.msra.mxu0 0.0
    %306 = vmatprep.subr.mxu0 0.0
    %307 = vmatpush1.msra.mxu0 0.0
    %308 = vmatprep.subr.mxu0 0.0
    %309 = vmatpush1.msra.mxu0 0.0
    %310 = vmatprep.subr.mxu0 0.0
    %311 = vmatpush1.msra.mxu0 0.0
    %312 = vmatprep.subr.mxu0 0.0
    %313 = vmatpush1.msra.mxu0 0.0
    %314 = vmatprep.subr.mxu0 0.0
    %315 = vmatpush1.msra.mxu0 0.0
    %316 = vmatprep.subr.mxu0 0.0
    %317 = vmatpush1.msra.mxu0 0.0
    %318 = vmatprep.subr.mxu0 0.0
    %319 = vmatpush1.msra.mxu0 0.0
    %320 = vmatprep.subr.mxu0 0.0
    %321 = vmatpush1.msra.mxu0 0.0
    %322 = vmatprep.subr.mxu0 0.0
    %323 = vmatpush1.msra.mxu0 0.0
    %324 = vmatprep.subr.mxu0 0.0
    %325 = vmatpush1.msra.mxu0 0.0
    %326 = vmatprep.subr.mxu0 0.0
    %327 = vmatpush1.msra.mxu0 0.0
    %328 = vmatprep.subr.mxu0 0.0
    %329 = vmatpush1.msra.mxu0 0.0
    %330 = vmatprep.subr.mxu0 0.0
    %331 = vmatpush1.msra.mxu0 0.0
    %332 = vmatprep.subr.mxu0 0.0
    %333 = vmatpush1.msra.mxu0 0.0
    %334 = vmatprep.subr.mxu0 0.0
    %335 = vmatpush1.msra.mxu0 0.0
    %336 = vmatprep.subr.mxu0 0.0
    %337 = vmatpush1.msra.mxu0 0.0
    %338 = vmatprep.subr.mxu0 0.0
    %339 = vmatpush1.msra.mxu0 0.0
    %340 = vmatprep.subr.mxu0 0.0
    %341 = vmatpush1.msra.mxu0 0.0
    %342 = vmatprep.subr.mxu0 0.0
    %343 = vmatpush1.msra.mxu0 0.0
    %344 = vmatprep.subr.mxu0 0.0
    %345 = vmatpush1.msra.mxu0 0.0
    %346 = vmatprep.subr.mxu0 0.0
    %347 = vmatpush1.msra.mxu0 0.0
    %348 = vmatprep.mubr.f32.mxu0 0.0
    %349 = vmatmul.mubr.f32.gmra.mrb[0].mxu0 %v282
    %v350 = vpop.f32.mrb[0].mxu0
    %v351 = vadd.f32 0.0, %v350
    %v352 = vpop.f32.mrb[0].mxu0
    %353 = vdwg.mxu0
    %v355 = vsel %vm219, %v249, 0
    %357 = vmatprep.subr.mxu0 0.0
    %358 = vmatpush1.msra.mxu0 %v280
    %359 = vmatprep.subr.mxu0 0.0
    %360 = vmatpush1.msra.mxu0 0.0
    %361 = vmatprep.subr.mxu0 0.0
    %362 = vmatpush1.msra.mxu0 0.0
    %363 = vmatprep.subr.mxu0 0.0
    %364 = vmatpush1.msra.mxu0 0.0
    %365 = vmatprep.subr.mxu0 0.0
    %366 = vmatpush1.msra.mxu0 0.0
    %367 = vmatprep.subr.mxu0 0.0
    %368 = vmatpush1.msra.mxu0 0.0
    %369 = vmatprep.subr.mxu0 0.0
    %370 = vmatpush1.msra.mxu0 0.0
    %371 = vmatprep.subr.mxu0 0.0
    %372 = vmatpush1.msra.mxu0 0.0
    %373 = vmatprep.subr.mxu0 0.0
    %374 = vmatpush1.msra.mxu0 0.0
    %375 = vmatprep.subr.mxu0 0.0
    %376 = vmatpush1.msra.mxu0 0.0
    %377 = vmatprep.subr.mxu0 0.0
    %378 = vmatpush1.msra.mxu0 0.0
    %379 = vmatprep.subr.mxu0 0.0
    %380 = vmatpush1.msra.mxu0 0.0
    %381 = vmatprep.subr.mxu0 0.0
    %382 = vmatpush1.msra.mxu0 0.0
    %383 = vmatprep.subr.mxu0 0.0
    %384 = vmatpush1.msra.mxu0 0.0
    %385 = vmatprep.subr.mxu0 0.0
    %386 = vmatpush1.msra.mxu0 0.0
    %387 = vmatprep.subr.mxu0 0.0
    %388 = vmatpush1.msra.mxu0 0.0
    %389 = vmatprep.subr.mxu0 0.0
    %390 = vmatpush1.msra.mxu0 0.0
    %391 = vmatprep.subr.mxu0 0.0
    %392 = vmatpush1.msra.mxu0 0.0
    %393 = vmatprep.subr.mxu0 0.0
    %394 = vmatpush1.msra.mxu0 0.0
    %395 = vmatprep.subr.mxu0 0.0
    %396 = vmatpush1.msra.mxu0 0.0
    %397 = vmatprep.subr.mxu0 0.0
    %398 = vmatpush1.msra.mxu0 0.0
    %399 = vmatprep.subr.mxu0 0.0
    %400 = vmatpush1.msra.mxu0 0.0
    %401 = vmatprep.subr.mxu0 0.0
    %402 = vmatpush1.msra.mxu0 0.0
    %403 = vmatprep.subr.mxu0 0.0
    %404 = vmatpush1.msra.mxu0 0.0
    %405 = vmatprep.subr.mxu0 0.0
    %406 = vmatpush1.msra.mxu0 0.0
    %407 = vmatprep.subr.mxu0 0.0
    %408 = vmatpush1.msra.mxu0 0.0
    %409 = vmatprep.subr.mxu0 0.0
    %410 = vmatpush1.msra.mxu0 0.0
    %411 = vmatprep.subr.mxu0 0.0
    %412 = vmatpush1.msra.mxu0 0.0
    %413 = vmatprep.subr.mxu0 0.0
    %414 = vmatpush1.msra.mxu0 0.0
    %415 = vmatprep.subr.mxu0 0.0
    %416 = vmatpush1.msra.mxu0 0.0
    %417 = vmatprep.subr.mxu0 0.0
    %418 = vmatpush1.msra.mxu0 0.0
    %419 = vmatprep.subr.mxu0 0.0
    %420 = vmatpush1.msra.mxu0 0.0
    %421 = vmatprep.mubr.f32.mxu0 0.0
    %422 = vmatmul.mubr.f32.gmra.mrb[0].mxu0 %v355
    %v423 = vpop.f32.mrb[0].mxu0
    %v424 = vadd.f32 0.0, %v423
    %v425 = vpop.f32.mrb[0].mxu0
    %426 = vdwg.mxu0
    %v427 = vadd.f32 %v277, %v351
    %v428 = vadd.f32 %v278, %v424
    %429 = vst.msk [vmem:[#allocation4] sm:$0xff] %vm64, %v427
    %430 = vst.msk [vmem:[#allocation4 + $0x8] sm:$0xff] %vm64, %v428
    %431 = vst.msk [vmem:[#allocation2] sm:$0xff] %vm262, %v226
    %432 = vst.msk [vmem:[#allocation2 + $0x8] sm:$0xff] %vm262, %v227
    // Predicated region
    $region30: #{tpu_custom_call.1} parent=1 // pred_check
      %p433 = pneg %p46
    $region31: #{tpu_custom_call.1} parent=1 // pred_check_branch
      %435 = sbr.rel (%p433) target = $region33
    $region32: #{tpu_custom_call.1} parent=1 // pred_region
      %v436 = vld [vmem:[#allocation3] sm:$0xff]
      %v437 = vld [vmem:[#allocation3 + $0x8] sm:$0xff]
      %v438 = vrcp.pop %v436
      %v439 = vrcp.pop %v437
      %v440 = vmul.f32 %v436, %v438
      %v441 = vmul.f32 %v437, %v439
      %v442 = vsub.f32 2.0, %v440
      %v443 = vsub.f32 2.0, %v441
      %v444 = vmul.f32 %v438, %v442
      %v445 = vmul.f32 %v439, %v443
      %v446 = vld [vmem:[%s3] sm:$0xff]
      %v447 = vld [vmem:[%s3 + $0x8] sm:$0xff]
      %v448 = vld [vmem:[#allocation4] sm:$0xff]
      %v449 = vld [vmem:[#allocation4 + $0x8] sm:$0xff]
      %v450 = vmul.f32 %v444, %v446
      %v451 = vmul.f32 %v445, %v447
      %453 = vset.pattern.permute.xlu0 0
      %454 = vperm.xlu0 %453, %v450
      %v455 = vpop.permute.xlu0 %454
      %458 = vset.pattern.permute.xlu0 0
      %459 = vperm.xlu0 %458, %v451
      %v460 = vpop.permute.xlu0 %459
      %v462 = vmul.f32 %v448, %v455
      %v463 = vmul.f32 %v449, %v460
      %464 = vst.msk [vmem:[#allocation10] sm:$0xff] %vm64, %v462
      %465 = vst.msk [vmem:[#allocation10 + $0x8] sm:$0xff] %vm64, %v463
    $region33: #{tpu_custom_call.1} parent=1 // pred_fallthru
      _
    // Predicated region
    $region34: #{tpu_custom_call.1} parent=1 // pred_check
      _
    $region35: #{tpu_custom_call.1} parent=1 // pred_check_branch
      %467 = sbr.rel (0) target = $region37
    $region36: #{tpu_custom_call.1} parent=1 // pred_region
      %s469 = ssub.s32 256, 256
      %470 = vsyncadd [#allocation7], %s469
      %s471 = sshll.u32 [#allocation10], 4
      %s472 = int_to_ptr.vmem [resolvable:$true] %s471
      %477 = dma.vmem_to_hbm [thread:$0]  %s472, 256, %s4, [#allocation7], 128, 128, 8
    $region37: #{tpu_custom_call.1} parent=1 // pred_fallthru
      _
    // Predicated region
    $region38: #{tpu_custom_call.1} parent=1 // pred_check
      _
    $region39: #{tpu_custom_call.1} parent=1 // pred_check_branch
      %479 = sbr.rel (0) target = $region41
    $region40: #{tpu_custom_call.1} parent=1 // pred_region
      %480 = dma.done [#allocation7], 256
    $region41: #{tpu_custom_call.1} parent=1 // pred_fallthru
      _
    %481 = vsyncpa [#allocation6], 1
    %482 = vsyncpa [#allocation9], 1
    %483 = vsyncpa [#allocation7], 1

</llo_original>
